<compile_context>
chip_gen: v7x
topology: tpu7x:2x2x1
jax: 0.10.0
libtpu: 0.0.40
codegen_flags: <defaults>
</compile_context>

<pallas_src>
import functools

import jax
import jax.numpy as jnp
from jax.experimental import pallas as pl
from jax.experimental.pallas import tpu as pltpu


def _taps_by_phase(n_taps, stride, dilation):
    """Group tap indices k by phase r = (k*dilation) % stride (q = quotient)."""
    phases = [[] for _ in range(stride)]
    for k in range(n_taps):
        q, r = divmod(k * dilation, stride)
        phases[r].append((k, q))
    return phases


def _dwconv1d_kernel(*refs, n_taps, stride, dilation, l_out, n_acc, row_chunk,
                     has_bias, cast_planes):
    """Depthwise strided conv over one row tile.

    refs (in order): xp_ref  (stride, row_tile, m)    phase-split input
                     w_ref   (row_tile, n_taps)       per-row filters
                     [b_ref  (row_tile, 1)]           optional per-row bias
                     o_ref   (row_tile, l_out)        natural-layout output
                     [xf_ref (stride, row_chunk, m)]  f32 scratch (non-f32 x)
    with xp_ref[r, row, q] == x_padded[row, q*stride + r].
    """
    it = iter(refs)
    xp_ref = next(it)
    w_ref = next(it)
    b_ref = next(it) if has_bias else None
    o_ref = next(it)
    xf_ref = next(it) if cast_planes else None

    row_tile = o_ref.shape[0]
    n_chunks = row_tile // row_chunk
    phases = _taps_by_phase(n_taps, stride, dilation)

    def chunk_body(c):
        r0 = c * row_chunk
        if not isinstance(r0, int):
            r0 = pl.multiple_of(r0, row_chunk)
        rsel = pl.ds(r0, row_chunk)

        # Hoisted per-chunk weight load + cast (not per tap).
        w = w_ref[rsel, :].astype(jnp.float32)                 # (RC, n_taps)

        if cast_planes:
            # Cast the stride phase planes to f32 once per chunk (4x fewer
            # cast elements than per-tap casts), staged through VMEM scratch
            # so only (RC, l_out)-sized values stay live in vregs.
            xf_ref[...] = xp_ref[:, rsel, :].astype(jnp.float32)

        # Independent partial sums keep VALU slots busy instead of a serial
        # n_taps-deep add chain.
        accs = [jnp.zeros((row_chunk, l_out), jnp.float32) for _ in range(n_acc)]
        t = 0
        for r, taps in enumerate(phases):
            if not taps:
                continue
            q_max = max(q for _, q in taps)
            # One lane-aligned load per phase; per-tap offsets are cheap
            # static value slices.
            if cast_planes:
                xw = xf_ref[r, :, 0:q_max + l_out]
            else:
                xw = xp_ref[r, rsel, 0:q_max + l_out].astype(jnp.float32)
            for k, q in taps:
                xk = xw[:, q:q + l_out]                        # (RC, l_out)
                accs[t % n_acc] = accs[t % n_acc] + xk * w[:, k:k + 1]
                t += 1

        while len(accs) > 1:                                   # tree reduce
            nxt = [accs[i] + accs[i + 1] for i in range(0, len(accs) - 1, 2)]
            if len(accs) % 2:
                nxt.append(accs[-1])
            accs = nxt
        acc = accs[0]
        if has_bias:
            acc = acc + b_ref[rsel, :].astype(jnp.float32)     # fused bias add
        o_ref[rsel, :] = acc.astype(o_ref.dtype)

    if n_chunks == 1:
        chunk_body(0)
    else:
        # Real (non-unrolled) loop so only one chunk's accumulators are live
        # at a time -> no vreg spills for large l_out.
        @pl.loop(0, n_chunks)
        def _(c):
            chunk_body(c)


def conv1d_dynamic(x, weight, *, bias=None, stride=4, padding=6, dilation=1):
    """Pallas equivalent of Conv1dDynamic.forward (F.conv1d with groups=T)."""
    B, T, D = x.shape
    n_taps = weight.shape[-1]
    assert T <= weight.shape[0], "groups=T requires T <= weight.shape[0]"
    w = weight[:T, 0, :]                                       # (T, n_taps)

    l_out = (D + 2 * padding - dilation * (n_taps - 1) - 1) // stride + 1
    assert l_out >= 1, "empty output"
    span = (l_out - 1) * stride + dilation * (n_taps - 1) + 1
    l_pad = pl.cdiv(max(span, padding + D), stride) * stride
    m = l_pad // stride
    q_max = (dilation * (n_taps - 1)) // stride
    assert q_max + l_out <= m

    rows = B * T
    itemsize = jnp.dtype(x.dtype).itemsize
    sub = max(8, 32 // max(itemsize, 1))                       # sublane granularity
    n_acc = min(4, n_taps)
    cast_planes = x.dtype != jnp.float32
    has_bias = bias is not None

    # ---- chip-aware VMEM budget (64 MiB v7x vs 128 MiB v5e/v6e) -----------
    try:
        vmem_cap = int(getattr(pltpu.get_tpu_info(), "vmem_capacity_bytes",
                               64 * 1024 * 1024))
    except Exception:
        vmem_cap = 64 * 1024 * 1024
    budget = (vmem_cap * 5) // 8            # ~40 MiB on v7x, ~80 MiB on v5e/v6e
    vmem_limit = max(32 * 1024 * 1024,
                     min((vmem_cap * 4) // 5, 128 * 1024 * 1024))

    # ---- inner row chunk: bound live f32 accumulator vregs -----------------
    lvregs = max(1, pl.cdiv(l_out, 128))
    rc = sub
    while rc * 2 <= 32 and ((rc * 2) // 8) * lvregs * (n_acc + 3) <= 48:
        rc *= 2
    rc = max(sub, min(rc, pl.cdiv(rows, sub) * sub))           # no padding for tiny B*T

    # ---- row tile: largest multiple of rc that fits the budget while keeping
    # >= 4 grid steps when rows allow (v7x: 2 TCs + pipeline overlap) ---------
    def step_bytes(rt, n_in_buf=2):
        in_b = n_in_buf * stride * m * rt * itemsize           # xp block (multi-buffered)
        w_b = 2 * n_taps * rt * itemsize
        b_b = 2 * rt * itemsize
        out_b = 2 * l_out * rt * itemsize
        tmp_b = (n_acc + 3) * rc * l_out * 4                   # live f32 temporaries
        scr_b = stride * rc * m * 4 if cast_planes else 0      # f32 cast scratch
        return in_b + w_b + b_b + out_b + tmp_b + scr_b

    rows_c = pl.cdiv(rows, rc) * rc
    desired_steps = min(4, rows_c // rc)
    max_rt = rc
    while max_rt * 2 <= 4096 and step_bytes(max_rt * 2) <= budget:
        max_rt *= 2
    row_tile = max(rc, min(max_rt, pl.cdiv(rows_c, desired_steps * rc) * rc))
    rows_p = pl.cdiv(rows, row_tile) * row_tile
    grid_steps = rows_p // row_tile
    deep_buf = grid_steps >= 3 and step_bytes(row_tile, n_in_buf=3) <= budget

    # ---- layout plumbing (wrapper side) ------------------------------------
    # Zero-pad + phase-split: xp[r, row, q] = x_padded[row, q*stride + r].
    # Rows pad only to the row-tile granularity; the kernel output needs NO
    # relayout afterwards.
    x2 = x.reshape(rows, D)
    x2 = jnp.pad(x2, ((0, rows_p - rows), (padding, l_pad - padding - D)))
    xp = x2.reshape(rows_p, m, stride).transpose(2, 0, 1)      # (stride, rows_p, m)

    # Per-row depthwise filters (row b*T + t -> filter t); tiny next to x.
    w_rows = jnp.pad(jnp.tile(w, (B, 1)), ((0, rows_p - rows), (0, 0)))

    operands = [xp, w_rows]

    def _xp_spec():
        idx = lambda i: (0, i, 0)
        if deep_buf:
            try:                                               # deeper input pipeline
                return pl.BlockSpec((stride, row_tile, m), idx,
                                    pipeline_mode=pl.Buffered(3))
            except Exception:
                pass
        return pl.BlockSpec((stride, row_tile, m), idx)

    in_specs = [
        _xp_spec(),
        pl.BlockSpec((row_tile, n_taps), lambda i: (i, 0)),
    ]
    if has_bias:
        b_rows = jnp.pad(jnp.tile(bias[:T], (B,)), (0, rows_p - rows))
        operands.append(b_rows.reshape(rows_p, 1))
        in_specs.append(pl.BlockSpec((row_tile, 1), lambda i: (i, 0)))

    scratch_shapes = []
    if cast_planes:
        scratch_shapes.append(pltpu.VMEM((stride, rc, m), jnp.float32))

    kernel = functools.partial(
        _dwconv1d_kernel, n_taps=n_taps, stride=stride, dilation=dilation,
        l_out=l_out, n_acc=n_acc, row_chunk=rc, has_bias=has_bias,
        cast_planes=cast_planes)

    out = pl.pallas_call(
        kernel,
        out_shape=jax.ShapeDtypeStruct((rows_p, l_out), x.dtype),
        grid=(grid_steps,),
        in_specs=in_specs,
        out_specs=pl.BlockSpec((row_tile, l_out), lambda i: (i, 0)),
        scratch_shapes=tuple(scratch_shapes),
        compiler_params=pltpu.CompilerParams(
            dimension_semantics=("parallel",),
            vmem_limit_bytes=int(vmem_limit),
        ),
    )(*operands)

    if rows_p != rows:
        out = out[:rows]
    return out.reshape(B, T, l_out)


def _reference(x, weight, T, *, bias=None, stride=4, padding=6, dilation=1):
    out = jax.lax.conv_general_dilated(
        x, weight[:T], window_strides=(stride,), padding=[(padding, padding)],
        rhs_dilation=(dilation,), dimension_numbers=("NCH", "OIH", "NCH"),
        feature_group_count=T)
    if bias is not None:
        out = out + bias[:T][None, :, None]
    return out


if __name__ == "__main__":
    key = jax.random.PRNGKey(0)
    k_w, k_x1, k_x2, k_x3, k_b = jax.random.split(key, 5)

    # Same shape/scale as nn.Parameter(torch.randn(128, 1, 16) * 0.02).
    weight = jax.random.normal(k_w, (128, 1, 16), jnp.float32) * 0.02

    fwd = jax.jit(lambda x, w: conv1d_dynamic(x, w))
    fwd_bias = jax.jit(lambda x, w, b: conv1d_dynamic(x, w, bias=b))

    # 1) Small-rows regime (module's typical tiny call): 8 rows, 1 grid step.
    B, T, D = 2, 4, 64
    x1 = jax.random.normal(k_x1, (B, T, D), jnp.float32)
    out1 = jax.block_until_ready(fwd(x1, weight))
    ref1 = _reference(x1, weight, T)
    assert out1.shape == ref1.shape == (B, T, (D + 2 * 6 - 16) // 4 + 1)
    assert jnp.allclose(out1, ref1, atol=1e-5, rtol=1e-5), \
        float(jnp.max(jnp.abs(out1 - ref1)))

    # 2) Multi-step parallel grid (4 steps), inner row-chunk loop, fused bias,
    #    deeper (3x) input buffering.
    B, T, D = 8, 32, 256
    x2 = jax.random.normal(k_x2, (B, T, D), jnp.float32)
    bias = jax.random.normal(k_b, (T,), jnp.float32) * 0.1
    out2 = jax.block_until_ready(fwd_bias(x2, weight, bias))
    ref2 = _reference(x2, weight, T, bias=bias)
    assert out2.shape == ref2.shape
    assert jnp.allclose(out2, ref2, atol=1e-5, rtol=1e-5), \
        float(jnp.max(jnp.abs(out2 - ref2)))

    # 3) bf16 input: exercises the once-per-chunk f32 cast-scratch path.
    B, T, D = 2, 8, 128
    x3 = jax.random.normal(k_x3, (B, T, D), jnp.float32).astype(jnp.bfloat16)
    out3 = jax.block_until_ready(fwd(x3, weight))
    ref3 = _reference(x3.astype(jnp.float32), weight, T)
    assert out3.shape == ref3.shape
    assert jnp.allclose(out3.astype(jnp.float32), ref3, atol=5e-3, rtol=5e-3), \
        float(jnp.max(jnp.abs(out3.astype(jnp.float32) - ref3)))

    print("KERNEL_OK")
</pallas_src>

<mosaic_0001>
module attributes {stable_mosaic.version = 11 : i64} {
  func.func @_dwconv1d_kernel(%arg0: i32, %arg1: memref<4x8x19xf32, #tpu.memory_space<vmem>>, %arg2: memref<8x16xf32, #tpu.memory_space<vmem>>, %arg3: memref<8x16xf32, #tpu.memory_space<vmem>>) attributes {dimension_semantics = [#tpu.dimension_semantics<parallel>], iteration_bounds = array<i64: 1>, scalar_prefetch = 0 : i64, scratch_operands = 0 : i64, tpu.core_type = #tpu.core_type<tc>, window_params = [{transform_indices = @transform_0, window_bounds = array<i64: 4, 8, 19>}, {transform_indices = @transform_1, window_bounds = array<i64: 8, 16>}, {transform_indices = @transform_2, window_bounds = array<i64: 8, 16>}]} {
    %c0 = arith.constant 0 : index
    %c0_0 = arith.constant 0 : index
    %0 = vector.load %arg2[%c0, %c0_0] : memref<8x16xf32, #tpu.memory_space<vmem>>, vector<8x16xf32>
    %cst = arith.constant 0.000000e+00 : f32
    %1 = vector.broadcast %cst : f32 to vector<8x16xf32>
    %cst_1 = arith.constant 0.000000e+00 : f32
    %2 = vector.broadcast %cst_1 : f32 to vector<8x16xf32>
    %cst_2 = arith.constant 0.000000e+00 : f32
    %3 = vector.broadcast %cst_2 : f32 to vector<8x16xf32>
    %cst_3 = arith.constant 0.000000e+00 : f32
    %4 = vector.broadcast %cst_3 : f32 to vector<8x16xf32>
    %c0_4 = arith.constant 0 : index
    %c0_5 = arith.constant 0 : index
    %c0_6 = arith.constant 0 : index
    %5 = vector.load %arg1[%c0_4, %c0_5, %c0_6] : memref<4x8x19xf32, #tpu.memory_space<vmem>>, vector<1x8x19xf32>
    %6 = vector.shape_cast %5 : vector<1x8x19xf32> to vector<8x19xf32>
    %7 = vector.extract_strided_slice %6 {offsets = [0, 0], sizes = [8, 16], strides = [1, 1]} : vector<8x19xf32> to vector<8x16xf32>
    %8 = vector.extract_strided_slice %0 {offsets = [0, 0], sizes = [8, 1], strides = [1, 1]} : vector<8x16xf32> to vector<8x1xf32>
    %9 = vector.broadcast %8 : vector<8x1xf32> to vector<8x16xf32>
    %10 = arith.mulf %7, %9 : vector<8x16xf32>
    %11 = arith.addf %1, %10 : vector<8x16xf32>
    %12 = vector.extract_strided_slice %6 {offsets = [0, 1], sizes = [8, 16], strides = [1, 1]} : vector<8x19xf32> to vector<8x16xf32>
    %13 = vector.extract_strided_slice %0 {offsets = [0, 4], sizes = [8, 1], strides = [1, 1]} : vector<8x16xf32> to vector<8x1xf32>
    %14 = vector.broadcast %13 : vector<8x1xf32> to vector<8x16xf32>
    %15 = arith.mulf %12, %14 : vector<8x16xf32>
    %16 = arith.addf %2, %15 : vector<8x16xf32>
    %17 = vector.extract_strided_slice %6 {offsets = [0, 2], sizes = [8, 16], strides = [1, 1]} : vector<8x19xf32> to vector<8x16xf32>
    %18 = vector.extract_strided_slice %0 {offsets = [0, 8], sizes = [8, 1], strides = [1, 1]} : vector<8x16xf32> to vector<8x1xf32>
    %19 = vector.broadcast %18 : vector<8x1xf32> to vector<8x16xf32>
    %20 = arith.mulf %17, %19 : vector<8x16xf32>
    %21 = arith.addf %3, %20 : vector<8x16xf32>
    %22 = vector.extract_strided_slice %6 {offsets = [0, 3], sizes = [8, 16], strides = [1, 1]} : vector<8x19xf32> to vector<8x16xf32>
    %23 = vector.extract_strided_slice %0 {offsets = [0, 12], sizes = [8, 1], strides = [1, 1]} : vector<8x16xf32> to vector<8x1xf32>
    %24 = vector.broadcast %23 : vector<8x1xf32> to vector<8x16xf32>
    %25 = arith.mulf %22, %24 : vector<8x16xf32>
    %26 = arith.addf %4, %25 : vector<8x16xf32>
    %c1 = arith.constant 1 : index
    %c0_7 = arith.constant 0 : index
    %c0_8 = arith.constant 0 : index
    %27 = vector.load %arg1[%c1, %c0_7, %c0_8] : memref<4x8x19xf32, #tpu.memory_space<vmem>>, vector<1x8x19xf32>
    %28 = vector.shape_cast %27 : vector<1x8x19xf32> to vector<8x19xf32>
    %29 = vector.extract_strided_slice %28 {offsets = [0, 0], sizes = [8, 16], strides = [1, 1]} : vector<8x19xf32> to vector<8x16xf32>
    %30 = vector.extract_strided_slice %0 {offsets = [0, 1], sizes = [8, 1], strides = [1, 1]} : vector<8x16xf32> to vector<8x1xf32>
    %31 = vector.broadcast %30 : vector<8x1xf32> to vector<8x16xf32>
    %32 = arith.mulf %29, %31 : vector<8x16xf32>
    %33 = arith.addf %11, %32 : vector<8x16xf32>
    %34 = vector.extract_strided_slice %28 {offsets = [0, 1], sizes = [8, 16], strides = [1, 1]} : vector<8x19xf32> to vector<8x16xf32>
    %35 = vector.extract_strided_slice %0 {offsets = [0, 5], sizes = [8, 1], strides = [1, 1]} : vector<8x16xf32> to vector<8x1xf32>
    %36 = vector.broadcast %35 : vector<8x1xf32> to vector<8x16xf32>
    %37 = arith.mulf %34, %36 : vector<8x16xf32>
    %38 = arith.addf %16, %37 : vector<8x16xf32>
    %39 = vector.extract_strided_slice %28 {offsets = [0, 2], sizes = [8, 16], strides = [1, 1]} : vector<8x19xf32> to vector<8x16xf32>
    %40 = vector.extract_strided_slice %0 {offsets = [0, 9], sizes = [8, 1], strides = [1, 1]} : vector<8x16xf32> to vector<8x1xf32>
    %41 = vector.broadcast %40 : vector<8x1xf32> to vector<8x16xf32>
    %42 = arith.mulf %39, %41 : vector<8x16xf32>
    %43 = arith.addf %21, %42 : vector<8x16xf32>
    %44 = vector.extract_strided_slice %28 {offsets = [0, 3], sizes = [8, 16], strides = [1, 1]} : vector<8x19xf32> to vector<8x16xf32>
    %45 = vector.extract_strided_slice %0 {offsets = [0, 13], sizes = [8, 1], strides = [1, 1]} : vector<8x16xf32> to vector<8x1xf32>
    %46 = vector.broadcast %45 : vector<8x1xf32> to vector<8x16xf32>
    %47 = arith.mulf %44, %46 : vector<8x16xf32>
    %48 = arith.addf %26, %47 : vector<8x16xf32>
    %c2 = arith.constant 2 : index
    %c0_9 = arith.constant 0 : index
    %c0_10 = arith.constant 0 : index
    %49 = vector.load %arg1[%c2, %c0_9, %c0_10] : memref<4x8x19xf32, #tpu.memory_space<vmem>>, vector<1x8x19xf32>
    %50 = vector.shape_cast %49 : vector<1x8x19xf32> to vector<8x19xf32>
    %51 = vector.extract_strided_slice %50 {offsets = [0, 0], sizes = [8, 16], strides = [1, 1]} : vector<8x19xf32> to vector<8x16xf32>
    %52 = vector.extract_strided_slice %0 {offsets = [0, 2], sizes = [8, 1], strides = [1, 1]} : vector<8x16xf32> to vector<8x1xf32>
    %53 = vector.broadcast %52 : vector<8x1xf32> to vector<8x16xf32>
    %54 = arith.mulf %51, %53 : vector<8x16xf32>
    %55 = arith.addf %33, %54 : vector<8x16xf32>
    %56 = vector.extract_strided_slice %50 {offsets = [0, 1], sizes = [8, 16], strides = [1, 1]} : vector<8x19xf32> to vector<8x16xf32>
    %57 = vector.extract_strided_slice %0 {offsets = [0, 6], sizes = [8, 1], strides = [1, 1]} : vector<8x16xf32> to vector<8x1xf32>
    %58 = vector.broadcast %57 : vector<8x1xf32> to vector<8x16xf32>
    %59 = arith.mulf %56, %58 : vector<8x16xf32>
    %60 = arith.addf %38, %59 : vector<8x16xf32>
    %61 = vector.extract_strided_slice %50 {offsets = [0, 2], sizes = [8, 16], strides = [1, 1]} : vector<8x19xf32> to vector<8x16xf32>
    %62 = vector.extract_strided_slice %0 {offsets = [0, 10], sizes = [8, 1], strides = [1, 1]} : vector<8x16xf32> to vector<8x1xf32>
    %63 = vector.broadcast %62 : vector<8x1xf32> to vector<8x16xf32>
    %64 = arith.mulf %61, %63 : vector<8x16xf32>
    %65 = arith.addf %43, %64 : vector<8x16xf32>
    %66 = vector.extract_strided_slice %50 {offsets = [0, 3], sizes = [8, 16], strides = [1, 1]} : vector<8x19xf32> to vector<8x16xf32>
    %67 = vector.extract_strided_slice %0 {offsets = [0, 14], sizes = [8, 1], strides = [1, 1]} : vector<8x16xf32> to vector<8x1xf32>
    %68 = vector.broadcast %67 : vector<8x1xf32> to vector<8x16xf32>
    %69 = arith.mulf %66, %68 : vector<8x16xf32>
    %70 = arith.addf %48, %69 : vector<8x16xf32>
    %c3 = arith.constant 3 : index
    %c0_11 = arith.constant 0 : index
    %c0_12 = arith.constant 0 : index
    %71 = vector.load %arg1[%c3, %c0_11, %c0_12] : memref<4x8x19xf32, #tpu.memory_space<vmem>>, vector<1x8x19xf32>
    %72 = vector.shape_cast %71 : vector<1x8x19xf32> to vector<8x19xf32>
    %73 = vector.extract_strided_slice %72 {offsets = [0, 0], sizes = [8, 16], strides = [1, 1]} : vector<8x19xf32> to vector<8x16xf32>
    %74 = vector.extract_strided_slice %0 {offsets = [0, 3], sizes = [8, 1], strides = [1, 1]} : vector<8x16xf32> to vector<8x1xf32>
    %75 = vector.broadcast %74 : vector<8x1xf32> to vector<8x16xf32>
    %76 = arith.mulf %73, %75 : vector<8x16xf32>
    %77 = arith.addf %55, %76 : vector<8x16xf32>
    %78 = vector.extract_strided_slice %72 {offsets = [0, 1], sizes = [8, 16], strides = [1, 1]} : vector<8x19xf32> to vector<8x16xf32>
    %79 = vector.extract_strided_slice %0 {offsets = [0, 7], sizes = [8, 1], strides = [1, 1]} : vector<8x16xf32> to vector<8x1xf32>
    %80 = vector.broadcast %79 : vector<8x1xf32> to vector<8x16xf32>
    %81 = arith.mulf %78, %80 : vector<8x16xf32>
    %82 = arith.addf %60, %81 : vector<8x16xf32>
    %83 = vector.extract_strided_slice %72 {offsets = [0, 2], sizes = [8, 16], strides = [1, 1]} : vector<8x19xf32> to vector<8x16xf32>
    %84 = vector.extract_strided_slice %0 {offsets = [0, 11], sizes = [8, 1], strides = [1, 1]} : vector<8x16xf32> to vector<8x1xf32>
    %85 = vector.broadcast %84 : vector<8x1xf32> to vector<8x16xf32>
    %86 = arith.mulf %83, %85 : vector<8x16xf32>
    %87 = arith.addf %65, %86 : vector<8x16xf32>
    %88 = vector.extract_strided_slice %72 {offsets = [0, 3], sizes = [8, 16], strides = [1, 1]} : vector<8x19xf32> to vector<8x16xf32>
    %89 = vector.extract_strided_slice %0 {offsets = [0, 15], sizes = [8, 1], strides = [1, 1]} : vector<8x16xf32> to vector<8x1xf32>
    %90 = vector.broadcast %89 : vector<8x1xf32> to vector<8x16xf32>
    %91 = arith.mulf %88, %90 : vector<8x16xf32>
    %92 = arith.addf %70, %91 : vector<8x16xf32>
    %93 = arith.addf %77, %82 : vector<8x16xf32>
    %94 = arith.addf %87, %92 : vector<8x16xf32>
    %95 = arith.addf %93, %94 : vector<8x16xf32>
    %c0_13 = arith.constant 0 : index
    %c0_14 = arith.constant 0 : index
    %96 = vector.load %arg3[%c0_13, %c0_14] : memref<8x16xf32, #tpu.memory_space<vmem>>, vector<8x16xf32>
    tpu.vector_store %arg3[%c0_13, %c0_14], %95 {strides = array<i32>} : memref<8x16xf32, #tpu.memory_space<vmem>>, vector<8x16xf32>,
    return
  }
  func.func @transform_0(%arg0: i32) -> (i32, i32, i32) {
    %c0_i32 = arith.constant 0 : i32
    %c0_i32_0 = arith.constant 0 : i32
    %c0_i32_1 = arith.constant 0 : i32
    return %c0_i32, %arg0, %c0_i32_0 : i32, i32, i32
  }
  func.func @transform_1(%arg0: i32) -> (i32, i32) {
    %c0_i32 = arith.constant 0 : i32
    %c0_i32_0 = arith.constant 0 : i32
    return %arg0, %c0_i32 : i32, i32
  }
  func.func @transform_2(%arg0: i32) -> (i32, i32) {
    %c0_i32 = arith.constant 0 : i32
    %c0_i32_0 = arith.constant 0 : i32
    return %arg0, %c0_i32 : i32, i32
  }
}

</mosaic_0001>

<llo_original>
// kernel: _lambda_.1
$region0: #{_lambda_.1}
  #allocation0 [shape = 'u32[]', space=smem, size = 0x4, offset = 0x4, fixed_abs, tag = 'smem constant byte address 0x4 - core index']
  #allocation1 [shape = 'u32[144,128]{1,0:T(1,128)}', space=vmem, size = 0x12000, scoped, tag = 'internal scratch']
  %s0 = inlined_call_operand.vmem [shape: f32[4,8,19], index: 0, kind: input, shape index: {}]
  %s1 = inlined_call_operand.vmem [shape: f32[8,16], index: 1, kind: input, shape index: {}]
  %s2 = inlined_call_operand.hbm [shape: f32[8,16], index: 2, kind: output, shape index: {}]
  %s3 = sld [smem:[#allocation0]]
  $region18: #{_lambda_.1} parent=0
    _
  %s5 = ssub.s32 1, %s3
  %s6 = scalar_select 0, %s5, %s3
  $region1: #{_lambda_.1} parent=0
    #allocation2 [shape = 'u8[4096]{0}', space=vmem, size = 0x1000, scoped, tag = 'output window, operand 0, single buffered']
    #allocation3 [shape = 's32[1]{0}', space=sflag, size = 0x4, scoped, tag = 'scoped memory for _lambda_.1']
    %7 = vsyncpa [#allocation3], 0
    // Predicated region
    $region2: #{_lambda_.1} parent=1 // pred_check
      _
    $region3: #{_lambda_.1} parent=1 // pred_check_branch
      %9 = sbr.rel (0) target = $region5
    $region4: #{_lambda_.1} parent=1 // pred_region
      _
    $region5: #{_lambda_.1} parent=1 // pred_fallthru
      _
    // Predicated region
    $region6: #{_lambda_.1} parent=1 // pred_check
      _
    $region7: #{_lambda_.1} parent=1 // pred_check_branch
      %11 = sbr.rel (0) target = $region9
    $region8: #{_lambda_.1} parent=1 // pred_region
      _
    $region9: #{_lambda_.1} parent=1 // pred_fallthru
      _
    %v12 = vld [vmem:[%s1] sm:$0xff]
    %v13 = vld [vmem:[%s0] sm:$0xff]
    %15 = vset.pattern.permute.xlu0 0
    %16 = vperm.xlu0 %15, %v12
    %v17 = vpop.permute.xlu0 %16
    %v19 = vmul.f32 %v13, %v17
    %v20 = vadd.f32 %v19, 0.0
    %21 = vset.pattern.permute.xlu0 4
    %22 = vperm.xlu0 %21, %v12
    %v23 = vpop.permute.xlu0 %22
    %v25 = vmul.f32 %v13, %v23
    %v26 = vadd.f32 %v25, 0.0
    %27 = vset.pattern.permute.xlu0 8
    %28 = vperm.xlu0 %27, %v12
    %v29 = vpop.permute.xlu0 %28
    %v31 = vmul.f32 %v13, %v29
    %v32 = vadd.f32 %v31, 0.0
    %33 = vset.pattern.permute.xlu0 12
    %34 = vperm.xlu0 %33, %v12
    %v35 = vpop.permute.xlu0 %34
    %v37 = vmul.f32 %v13, %v35
    %v38 = vadd.f32 %v37, 0.0
    %s39 = scalar_lea.vmem %s0, 8
    %v40 = vld [vmem:[%s39] sm:$0xff]
    %41 = vset.pattern.permute.xlu0 1
    %42 = vperm.xlu0 %41, %v12
    %v43 = vpop.permute.xlu0 %42
    %v45 = vmul.f32 %v40, %v43
    %v46 = vadd.f32 %v20, %v45
    %47 = vset.pattern.permute.xlu0 5
    %48 = vperm.xlu0 %47, %v12
    %v49 = vpop.permute.xlu0 %48
    %v51 = vmul.f32 %v40, %v49
    %v52 = vadd.f32 %v26, %v51
    %53 = vset.pattern.permute.xlu0 9
    %54 = vperm.xlu0 %53, %v12
    %v55 = vpop.permute.xlu0 %54
    %v57 = vmul.f32 %v40, %v55
    %v58 = vadd.f32 %v32, %v57
    %59 = vset.pattern.permute.xlu0 13
    %60 = vperm.xlu0 %59, %v12
    %v61 = vpop.permute.xlu0 %60
    %v63 = vmul.f32 %v40, %v61
    %v64 = vadd.f32 %v38, %v63
    %s65 = scalar_lea.vmem %s0, 16
    %v66 = vld [vmem:[%s65] sm:$0xff]
    %67 = vset.pattern.permute.xlu0 2
    %68 = vperm.xlu0 %67, %v12
    %v69 = vpop.permute.xlu0 %68
    %v71 = vmul.f32 %v66, %v69
    %v72 = vadd.f32 %v46, %v71
    %73 = vset.pattern.permute.xlu0 6
    %74 = vperm.xlu0 %73, %v12
    %v75 = vpop.permute.xlu0 %74
    %v77 = vmul.f32 %v66, %v75
    %v78 = vadd.f32 %v52, %v77
    %79 = vset.pattern.permute.xlu0 10
    %80 = vperm.xlu0 %79, %v12
    %v81 = vpop.permute.xlu0 %80
    %v83 = vmul.f32 %v66, %v81
    %v84 = vadd.f32 %v58, %v83
    %85 = vset.pattern.permute.xlu0 14
    %86 = vperm.xlu0 %85, %v12
    %v87 = vpop.permute.xlu0 %86
    %v89 = vmul.f32 %v66, %v87
    %v90 = vadd.f32 %v64, %v89
    %s91 = scalar_lea.vmem %s0, 24
    %v92 = vld [vmem:[%s91] sm:$0xff]
    %93 = vset.pattern.permute.xlu0 3
    %94 = vperm.xlu0 %93, %v12
    %v95 = vpop.permute.xlu0 %94
    %v97 = vmul.f32 %v92, %v95
    %v98 = vadd.f32 %v72, %v97
    %99 = vset.pattern.permute.xlu0 7
    %100 = vperm.xlu0 %99, %v12
    %v101 = vpop.permute.xlu0 %100
    %v103 = vmul.f32 %v92, %v101
    %v104 = vadd.f32 %v78, %v103
    %105 = vset.pattern.permute.xlu0 11
    %106 = vperm.xlu0 %105, %v12
    %v107 = vpop.permute.xlu0 %106
    %v109 = vmul.f32 %v92, %v107
    %v110 = vadd.f32 %v84, %v109
    %111 = vset.pattern.permute.xlu0 15
    %112 = vperm.xlu0 %111, %v12
    %v113 = vpop.permute.xlu0 %112
    %v115 = vmul.f32 %v92, %v113
    %v116 = vadd.f32 %v90, %v115
    %118 = vrot.lane.b32.xlu0 %v104, 127
    %v119 = vpop.permute.xlu0 %118
    %v121 = vadd.f32 %v98, %v119
    %123 = vrot.lane.b32.xlu0 %v116, 127
    %v124 = vpop.permute.xlu0 %123
    %v126 = vadd.f32 %v110, %v124
    %128 = vrot.lane.b32.xlu0 %v126, 126
    %v129 = vpop.permute.xlu0 %128
    %v131 = vadd.f32 %v121, %v129
    %vm132 = vcmask 130048
    %133 = vst.msk [vmem:[#allocation2] sm:$0xff] %vm132, %v131
    // Predicated region
    $region10: #{_lambda_.1} parent=1 // pred_check
      _
    $region11: #{_lambda_.1} parent=1 // pred_check_branch
      %135 = sbr.rel (0) target = $region13
    $region12: #{_lambda_.1} parent=1 // pred_region
      %s137 = ssub.s32 128, 128
      %138 = vsyncadd [#allocation3], %s137
      %s140 = sshll.u32 [#allocation2], 4
      %s141 = int_to_ptr.vmem [resolvable:$true] %s140
      %143 = dma.vmem_to_hbm [thread:$0]  %s141, 128, %s2, [#allocation3]
    $region13: #{_lambda_.1} parent=1 // pred_fallthru
      _
    // Predicated region
    $region14: #{_lambda_.1} parent=1 // pred_check
      _
    $region15: #{_lambda_.1} parent=1 // pred_check_branch
      %145 = sbr.rel (0) target = $region17
    $region16: #{_lambda_.1} parent=1 // pred_region
      %146 = dma.done [#allocation3], 128
    $region17: #{_lambda_.1} parent=1 // pred_fallthru
      _
    %147 = vsyncpa [#allocation3], 1

</llo_original>
